<compile_context>
chip_gen: v7x
topology: tpu7x:2x2x1
jax: 0.10.0
libtpu: 0.0.40
codegen_flags: <defaults>
</compile_context>

<pallas_src>
import functools

import jax
import jax.numpy as jnp
from jax.experimental import pallas as pl
from jax.experimental.pallas import tpu as pltpu


def inv_pixel_shuffle_kernel(x_ref, sel_ref, o_ref, *, ratio):
    # x_ref:   (1, Ct, Yt, r, W)   input rows for this (batch, C-tile, Y-tile)
    # sel_ref: (r, W, X)           hoisted 0/1 selection matrices (resident)
    # o_ref:   (1, Ct, r*r, Yt, X) output channel-groups for the same tile
    r = ratio
    _, Ct, Yt, _, W = x_ref.shape
    X = W // r

    for r1 in range(r):
        rows = x_ref[0, :, :, r1, :]          # (Ct, Yt, W): plain indexed load
        lhs = rows.reshape(Ct * Yt, W)        # free merge (Yt kept 8-aligned)
        for r2 in range(r):
            sel = sel_ref[r2]                 # (W, X), sel[w, xj] = (w == r*xj + r2)
            # MXU does the stride-r lane deinterleave; exact (one 1 per column).
            picked = jnp.dot(lhs, sel, preferred_element_type=jnp.float32)
            o_ref[0, :, r1 * r + r2, :, :] = (
                picked.reshape(Ct, Yt, X).astype(o_ref.dtype))


def _divisors_desc(n):
    ds = set()
    i = 1
    while i * i <= n:
        if n % i == 0:
            ds.add(i)
            ds.add(n // i)
        i += 1
    return sorted(ds, reverse=True)


def _round_up(a, m):
    return -(-a // m) * m


def _choose_tiles(C, Y, r, W, X, itemsize, budget_bytes=8 * 1024 * 1024):
    """Largest (Ct, Yt) whose double-buffered in+out blocks fit the budget."""
    in_sublanes = _round_up(r, 8)  # input block minor dims (r, W) pad r -> 8 sublanes

    def block_bytes(ct, yt):
        in_b = ct * yt * in_sublanes * W * itemsize
        out_b = ct * r * r * _round_up(yt, 8) * X * itemsize
        return 2 * (in_b + out_b)  # x2: BlockSpec double buffering

    y_divs = _divisors_desc(Y)
    yts = [d for d in y_divs if d % 8 == 0] or y_divs
    # Ct > 1 relies on the free (Ct, Yt)->(Ct*Yt) sublane merge, which needs
    # Yt % 8 == 0; otherwise keep Ct = 1 (leading size-1 merge is always free).
    cts = _divisors_desc(C) if yts[0] % 8 == 0 else [1]
    for ct in cts:
        for yt in yts:
            if block_bytes(ct, yt) <= budget_bytes:
                return ct, yt
    return cts[-1], yts[-1]


def inv_pixel_shuffle(x_nchw, ratio=2):
    """x_nchw: (B, C, H, W) -> (B, C*ratio**2, H//ratio, W//ratio)."""
    B, C, H, W = x_nchw.shape
    r = ratio
    assert H % r == 0 and W % r == 0, (H, W, r)
    Y, X = H // r, W // r

    # Hoisted 0/1 selection matrices: sel[r2, w, xj] = (w == r*xj + r2).
    w_ids = jnp.arange(W, dtype=jnp.int32)[None, :, None]
    x_ids = jnp.arange(X, dtype=jnp.int32)[None, None, :]
    r2_ids = jnp.arange(r, dtype=jnp.int32)[:, None, None]
    sel = (w_ids == r * x_ids + r2_ids).astype(x_nchw.dtype)  # (r, W, X)

    # Free contiguous reshape: expose the (Y, r1) split so r1 selection and yi
    # placement are pure BlockSpec/DMA layout, not compute.
    x5 = x_nchw.reshape(B, C, Y, r, W)

    Ct, Yt = _choose_tiles(C, Y, r, W, X, x_nchw.dtype.itemsize)
    grid = (B, C // Ct, Y // Yt)

    out5 = pl.pallas_call(
        functools.partial(inv_pixel_shuffle_kernel, ratio=r),
        out_shape=jax.ShapeDtypeStruct((B, C, r * r, Y, X), x_nchw.dtype),
        grid_spec=pltpu.PrefetchScalarGridSpec(
            num_scalar_prefetch=0,
            grid=grid,
            in_specs=[
                pl.BlockSpec((1, Ct, Yt, r, W),
                             lambda b, ci, yi: (b, ci, yi, 0, 0)),
                # Constant index_map -> fetched once, resident across all steps.
                pl.BlockSpec((r, W, X), lambda b, ci, yi: (0, 0, 0)),
            ],
            out_specs=pl.BlockSpec((1, Ct, r * r, Yt, X),
                                   lambda b, ci, yi: (b, ci, 0, yi, 0)),
        ),
        compiler_params=pltpu.CompilerParams(
            dimension_semantics=("parallel", "parallel", "parallel"),
            vmem_limit_bytes=32 * 1024 * 1024,
        ),
    )(x5, sel)

    # Free contiguous reshape to the PyTorch layout (channel = c*r*r + r1*r + r2).
    return out5.reshape(B, C * r * r, Y, X)


def _reference(x, ratio):
    B, C, H, W = x.shape
    t = x.reshape(B, C, H // ratio, ratio, W // ratio, ratio)
    t = jnp.transpose(t, (0, 1, 3, 5, 2, 4))
    return t.reshape(B, C * ratio * ratio, H // ratio, W // ratio)


if __name__ == "__main__":
    ratio = 2
    N, C, H, W = 2, 4, 16, 16

    key = jax.random.PRNGKey(0)
    x = jax.random.normal(key, (N, C, H, W), dtype=jnp.float32)

    out = inv_pixel_shuffle(x, ratio=ratio)
    out = jax.block_until_ready(out)

    ref = _reference(x, ratio)
    assert out.shape == (N, C * ratio * ratio, H // ratio, W // ratio)
    assert jnp.max(jnp.abs(out - ref)) == 0.0, "mismatch vs reference"

    print("KERNEL_OK")
</pallas_src>

<mosaic_0001>
module attributes {stable_mosaic.version = 11 : i64} {
  func.func @inv_pixel_shuffle_kernel(%arg0: i32, %arg1: i32, %arg2: i32, %arg3: memref<1x4x8x2x16xf32, #tpu.memory_space<vmem>>, %arg4: memref<2x16x8xf32, #tpu.memory_space<vmem>>, %arg5: memref<1x4x4x8x8xf32, #tpu.memory_space<vmem>>) attributes {dimension_semantics = [#tpu.dimension_semantics<parallel>, #tpu.dimension_semantics<parallel>, #tpu.dimension_semantics<parallel>], iteration_bounds = array<i64: 2, 1, 1>, scalar_prefetch = 0 : i64, scratch_operands = 0 : i64, tpu.core_type = #tpu.core_type<tc>, window_params = [{transform_indices = @transform_0, window_bounds = array<i64: 1, 4, 8, 2, 16>}, {pipeline_mode = #tpu.pipeline_mode<synchronous>, transform_indices = @transform_1, window_bounds = array<i64: 2, 16, 8>}, {transform_indices = @transform_2, window_bounds = array<i64: 1, 4, 4, 8, 8>}]} {
    %c0 = arith.constant 0 : index
    %c0_0 = arith.constant 0 : index
    %c0_1 = arith.constant 0 : index
    %c0_2 = arith.constant 0 : index
    %c0_3 = arith.constant 0 : index
    %0 = vector.load %arg3[%c0, %c0_0, %c0_1, %c0_2, %c0_3] : memref<1x4x8x2x16xf32, #tpu.memory_space<vmem>>, vector<1x4x8x1x16xf32>
    %1 = vector.shape_cast %0 : vector<1x4x8x1x16xf32> to vector<4x8x16xf32>
    %2 = vector.shape_cast %1 : vector<4x8x16xf32> to vector<32x16xf32>
    %c0_4 = arith.constant 0 : index
    %c0_5 = arith.constant 0 : index
    %c0_6 = arith.constant 0 : index
    %3 = vector.load %arg4[%c0_4, %c0_5, %c0_6] : memref<2x16x8xf32, #tpu.memory_space<vmem>>, vector<1x16x8xf32>
    %4 = vector.shape_cast %3 : vector<1x16x8xf32> to vector<16x8xf32>
    %cst = arith.constant dense<0.000000e+00> : vector<32x8xf32>
    %5 = tpu.matmul %2, %4, %cst {dimension_numbers = #tpu.dot_dimension_numbers<[1], [0], [0], [1], [0, 0, 1, 1], [], []>} : vector<32x16xf32>, vector<16x8xf32>, vector<32x8xf32> -> vector<32x8xf32>
    %6 = vector.shape_cast %5 : vector<32x8xf32> to vector<4x8x8xf32>
    %c0_7 = arith.constant 0 : index
    %c0_8 = arith.constant 0 : index
    %c0_9 = arith.constant 0 : index
    %c0_10 = arith.constant 0 : index
    %c0_11 = arith.constant 0 : index
    %7 = vector.load %arg5[%c0_7, %c0_8, %c0_9, %c0_10, %c0_11] : memref<1x4x4x8x8xf32, #tpu.memory_space<vmem>>, vector<1x4x1x8x8xf32>
    %8 = vector.shape_cast %7 : vector<1x4x1x8x8xf32> to vector<4x8x8xf32>
    %9 = vector.shape_cast %6 : vector<4x8x8xf32> to vector<1x4x1x8x8xf32>
    tpu.vector_store %arg5[%c0_7, %c0_8, %c0_9, %c0_10, %c0_11], %9 {strides = array<i32>} : memref<1x4x4x8x8xf32, #tpu.memory_space<vmem>>, vector<1x4x1x8x8xf32>,
    %c1 = arith.constant 1 : index
    %c0_12 = arith.constant 0 : index
    %c0_13 = arith.constant 0 : index
    %10 = vector.load %arg4[%c1, %c0_12, %c0_13] : memref<2x16x8xf32, #tpu.memory_space<vmem>>, vector<1x16x8xf32>
    %11 = vector.shape_cast %10 : vector<1x16x8xf32> to vector<16x8xf32>
    %cst_14 = arith.constant dense<0.000000e+00> : vector<32x8xf32>
    %12 = tpu.matmul %2, %11, %cst_14 {dimension_numbers = #tpu.dot_dimension_numbers<[1], [0], [0], [1], [0, 0, 1, 1], [], []>} : vector<32x16xf32>, vector<16x8xf32>, vector<32x8xf32> -> vector<32x8xf32>
    %13 = vector.shape_cast %12 : vector<32x8xf32> to vector<4x8x8xf32>
    %c0_15 = arith.constant 0 : index
    %c0_16 = arith.constant 0 : index
    %c1_17 = arith.constant 1 : index
    %c0_18 = arith.constant 0 : index
    %c0_19 = arith.constant 0 : index
    %14 = vector.load %arg5[%c0_15, %c0_16, %c1_17, %c0_18, %c0_19] : memref<1x4x4x8x8xf32, #tpu.memory_space<vmem>>, vector<1x4x1x8x8xf32>
    %15 = vector.shape_cast %14 : vector<1x4x1x8x8xf32> to vector<4x8x8xf32>
    %16 = vector.shape_cast %13 : vector<4x8x8xf32> to vector<1x4x1x8x8xf32>
    tpu.vector_store %arg5[%c0_15, %c0_16, %c1_17, %c0_18, %c0_19], %16 {strides = array<i32>} : memref<1x4x4x8x8xf32, #tpu.memory_space<vmem>>, vector<1x4x1x8x8xf32>,
    %c0_20 = arith.constant 0 : index
    %c0_21 = arith.constant 0 : index
    %c0_22 = arith.constant 0 : index
    %c1_23 = arith.constant 1 : index
    %c0_24 = arith.constant 0 : index
    %17 = vector.load %arg3[%c0_20, %c0_21, %c0_22, %c1_23, %c0_24] : memref<1x4x8x2x16xf32, #tpu.memory_space<vmem>>, vector<1x4x8x1x16xf32>
    %18 = vector.shape_cast %17 : vector<1x4x8x1x16xf32> to vector<4x8x16xf32>
    %19 = vector.shape_cast %18 : vector<4x8x16xf32> to vector<32x16xf32>
    %c0_25 = arith.constant 0 : index
    %c0_26 = arith.constant 0 : index
    %c0_27 = arith.constant 0 : index
    %20 = vector.load %arg4[%c0_25, %c0_26, %c0_27] : memref<2x16x8xf32, #tpu.memory_space<vmem>>, vector<1x16x8xf32>
    %21 = vector.shape_cast %20 : vector<1x16x8xf32> to vector<16x8xf32>
    %cst_28 = arith.constant dense<0.000000e+00> : vector<32x8xf32>
    %22 = tpu.matmul %19, %21, %cst_28 {dimension_numbers = #tpu.dot_dimension_numbers<[1], [0], [0], [1], [0, 0, 1, 1], [], []>} : vector<32x16xf32>, vector<16x8xf32>, vector<32x8xf32> -> vector<32x8xf32>
    %23 = vector.shape_cast %22 : vector<32x8xf32> to vector<4x8x8xf32>
    %c0_29 = arith.constant 0 : index
    %c0_30 = arith.constant 0 : index
    %c2 = arith.constant 2 : index
    %c0_31 = arith.constant 0 : index
    %c0_32 = arith.constant 0 : index
    %24 = vector.load %arg5[%c0_29, %c0_30, %c2, %c0_31, %c0_32] : memref<1x4x4x8x8xf32, #tpu.memory_space<vmem>>, vector<1x4x1x8x8xf32>
    %25 = vector.shape_cast %24 : vector<1x4x1x8x8xf32> to vector<4x8x8xf32>
    %26 = vector.shape_cast %23 : vector<4x8x8xf32> to vector<1x4x1x8x8xf32>
    tpu.vector_store %arg5[%c0_29, %c0_30, %c2, %c0_31, %c0_32], %26 {strides = array<i32>} : memref<1x4x4x8x8xf32, #tpu.memory_space<vmem>>, vector<1x4x1x8x8xf32>,
    %c1_33 = arith.constant 1 : index
    %c0_34 = arith.constant 0 : index
    %c0_35 = arith.constant 0 : index
    %27 = vector.load %arg4[%c1_33, %c0_34, %c0_35] : memref<2x16x8xf32, #tpu.memory_space<vmem>>, vector<1x16x8xf32>
    %28 = vector.shape_cast %27 : vector<1x16x8xf32> to vector<16x8xf32>
    %cst_36 = arith.constant dense<0.000000e+00> : vector<32x8xf32>
    %29 = tpu.matmul %19, %28, %cst_36 {dimension_numbers = #tpu.dot_dimension_numbers<[1], [0], [0], [1], [0, 0, 1, 1], [], []>} : vector<32x16xf32>, vector<16x8xf32>, vector<32x8xf32> -> vector<32x8xf32>
    %30 = vector.shape_cast %29 : vector<32x8xf32> to vector<4x8x8xf32>
    %c0_37 = arith.constant 0 : index
    %c0_38 = arith.constant 0 : index
    %c3 = arith.constant 3 : index
    %c0_39 = arith.constant 0 : index
    %c0_40 = arith.constant 0 : index
    %31 = vector.load %arg5[%c0_37, %c0_38, %c3, %c0_39, %c0_40] : memref<1x4x4x8x8xf32, #tpu.memory_space<vmem>>, vector<1x4x1x8x8xf32>
    %32 = vector.shape_cast %31 : vector<1x4x1x8x8xf32> to vector<4x8x8xf32>
    %33 = vector.shape_cast %30 : vector<4x8x8xf32> to vector<1x4x1x8x8xf32>
    tpu.vector_store %arg5[%c0_37, %c0_38, %c3, %c0_39, %c0_40], %33 {strides = array<i32>} : memref<1x4x4x8x8xf32, #tpu.memory_space<vmem>>, vector<1x4x1x8x8xf32>,
    return
  }
  func.func @transform_0(%arg0: i32, %arg1: i32, %arg2: i32) -> (i32, i32, i32, i32, i32) {
    %c0_i32 = arith.constant 0 : i32
    %c0_i32_0 = arith.constant 0 : i32
    %c0_i32_1 = arith.constant 0 : i32
    return %arg0, %arg1, %arg2, %c0_i32, %c0_i32_0 : i32, i32, i32, i32, i32
  }
  func.func @transform_1(%arg0: i32, %arg1: i32, %arg2: i32) -> (i32, i32, i32) {
    %c0_i32 = arith.constant 0 : i32
    %c0_i32_0 = arith.constant 0 : i32
    %c0_i32_1 = arith.constant 0 : i32
    %c0_i32_2 = arith.constant 0 : i32
    return %c0_i32, %c0_i32_0, %c0_i32_1 : i32, i32, i32
  }
  func.func @transform_2(%arg0: i32, %arg1: i32, %arg2: i32) -> (i32, i32, i32, i32, i32) {
    %c0_i32 = arith.constant 0 : i32
    %c0_i32_0 = arith.constant 0 : i32
    %c0_i32_1 = arith.constant 0 : i32
    return %arg0, %arg1, %c0_i32, %arg2, %c0_i32_0 : i32, i32, i32, i32, i32
  }
}

</mosaic_0001>

<llo_original>
// kernel: tpu_custom_call.1
$region0: #{tpu_custom_call.1}
  #allocation0 [shape = 'u32[]', space=smem, size = 0x4, offset = 0x4, fixed_abs, tag = 'smem constant byte address 0x4 - core index']
  #allocation1 [shape = 'u32[144,128]{1,0:T(1,128)}', space=vmem, size = 0x12000, scoped, tag = 'internal scratch']
  %s0 = inlined_call_operand.hbm [shape: f32[2,4,8,2,16], index: 0, kind: input, shape index: {}]
  %s1 = inlined_call_operand.vmem [shape: f32[2,16,8], index: 1, kind: input, shape index: {}]
  %s2 = inlined_call_operand.hbm [shape: f32[2,4,4,8,8], index: 2, kind: output, shape index: {}]
  %s3 = sld [smem:[#allocation0]]
  $region45: #{tpu_custom_call.1} parent=0
    _
  %s5 = ssub.s32 1, %s3
  %s6 = scalar_select 0, %s5, %s3
  $region1: #{tpu_custom_call.1} parent=0
    #allocation2 [shape = 'u8[65536]{0}', space=vmem, size = 0x10000, scoped, tag = 'input window, operand 0']
    #allocation3 [shape = 's32[2]{0}', space=sflag, size = 0x8, scoped, tag = 'scoped memory for tpu_custom_call.1']
    #allocation4 [shape = 's32[2]{0}', space=sflag, size = 0x8, scoped, tag = 'scoped memory for tpu_custom_call.1']
    #allocation5 [shape = 'u8[131072]{0}', space=vmem, size = 0x20000, scoped, tag = 'output window, operand 0']
    %7 = vsyncpa [#allocation3], 0
    %s8 = scalar_lea.sflag [#allocation3], 1
    %9 = vsyncpa %s8, 0
    %10 = vsyncpa [#allocation4], 0
    %s11 = scalar_lea.sflag [#allocation4], 1
    %12 = vsyncpa %s11, 0
    loop: start=0, step=1, limit=4
    $region2: #{tpu_custom_call.1} parent=1 // loop_pre_header
      _
    $region3: #{tpu_custom_call.1} parent=1 // loop_header
      %s14 = sphi 0, %s18
      %p15 = scmp.ge.s32.totalorder %s14, 4
      %s21 = sphi 0, %s40
      %s22 = sphi 0, %s36
      %s23 = sphi 0, %s32
      %s24 = sphi 0, %s21
      %s25 = sphi 0, %s22
      %s26 = sphi 0, %s23
      %s27 = sphi 0, %s24
      %s28 = sphi 0, %s25
      %s29 = sphi 0, %s26
      %s47 = sphi 0, %s49
      %s50 = sphi 0, %s47
      %s51 = sphi 0, %s50
      %s67 = sphi 0, %s51
      %s71 = sphi 0, %s71
      %s73 = sphi 0, %s71
      %s74 = sphi 0, %s73
      %s88 = sphi 0, %s74
      %s98 = sphi 0, %s100
      %s101 = sphi 0, %s98
      %s102 = sphi 0, %s101
      %s118 = sphi 0, %s102
    $region4: #{tpu_custom_call.1} parent=1 // loop_header_branch
      %17 = sbr.rel (%p15) target = $region8
    $region5: #{tpu_custom_call.1} parent=1 // loop_body
      %s19 = ssub.s32 %s14, 1
      %s20 = ssub.s32 %s14, 2
      %s30 = sadd.s32 1, %s23
      %p31 = scmp.ge.s32.totalorder %s30, 1
      %s32 = scalar_select %p31, 0, %s30
      %s33 = sadd.s32 1, %s22
      %s34 = scalar_select %p31, %s33, %s22
      %p35 = scmp.ge.s32.totalorder %s34, 1
      %s36 = scalar_select %p35, 0, %s34
      %s37 = sadd.s32 1, %s21
      %s38 = scalar_select %p35, %s37, %s21
      %p39 = scmp.ge.s32.totalorder %s38, 2
      %s40 = scalar_select %p39, 0, %s38
      %s41 = ssub.s32 %s21, %s40
      %s42 = ssub.s32 %s22, %s36
      %s43 = sor.u32 %s41, %s42
      %s44 = ssub.s32 %s23, %s32
      %s45 = sor.u32 %s43, %s44
      %p46 = scmp.eq.s32.totalorder %s45, 0
      %s48 = sadd.s32 %s47, 1
      %s49 = scalar_select %p46, %s47, %s48
      %p52 = pneg %p46
      %p53 = scmp.eq.s32.totalorder %s14, 1
      %p54 = por %p52, %p53
      %p55 = scmp.ne.s32.totalorder %s47, %s50
      %p56 = scmp.eq.s32.totalorder %s14, 0
      %p57 = por %p55, %p56
      %p58 = scmp.ne.s32.totalorder %s47, %s50
      %p59 = scmp.eq.s32.totalorder %s19, 1
      %p60 = por %p58, %p59
      %p61 = scmp.ne.s32.totalorder %s50, %s51
      %p62 = scmp.eq.s32.totalorder %s19, 0
      %p63 = por %p61, %p62
      %p64 = scmp.ne.s32.totalorder %s50, %s51
      %p65 = scmp.eq.s32.totalorder %s20, 1
      %p66 = por %p64, %p65
      %p68 = scmp.ne.s32.totalorder %s51, %s67
      %p69 = scmp.eq.s32.totalorder %s20, 0
      %p70 = por %p68, %p69
      %s72 = sadd.s32 %s71, 1
      %p75 = scmp.eq.s32.totalorder %s14, 1
      %p76 = scmp.ne.s32.totalorder %s71, %s73
      %p77 = scmp.eq.s32.totalorder %s14, 0
      %p78 = por %p76, %p77
      %p79 = scmp.ne.s32.totalorder %s71, %s73
      %p80 = scmp.eq.s32.totalorder %s19, 1
      %p81 = por %p79, %p80
      %p82 = scmp.ne.s32.totalorder %s73, %s74
      %p83 = scmp.eq.s32.totalorder %s19, 0
      %p84 = por %p82, %p83
      %p85 = scmp.ne.s32.totalorder %s73, %s74
      %p86 = scmp.eq.s32.totalorder %s20, 1
      %p87 = por %p85, %p86
      %p89 = scmp.ne.s32.totalorder %s74, %s88
      %p90 = scmp.eq.s32.totalorder %s20, 0
      %p91 = por %p89, %p90
      %s92 = ssub.s32 %s21, %s40
      %s93 = ssub.s32 %s22, %s36
      %s94 = sor.u32 %s92, %s93
      %s95 = ssub.s32 %s23, %s32
      %s96 = sor.u32 %s94, %s95
      %p97 = scmp.eq.s32.totalorder %s96, 0
      %s99 = sadd.s32 %s98, 1
      %s100 = scalar_select %p97, %s98, %s99
      %p103 = pneg %p97
      %p104 = scmp.eq.s32.totalorder %s14, 1
      %p105 = por %p103, %p104
      %p106 = scmp.ne.s32.totalorder %s98, %s101
      %p107 = scmp.eq.s32.totalorder %s14, 0
      %p108 = por %p106, %p107
      %p109 = scmp.ne.s32.totalorder %s98, %s101
      %p110 = scmp.eq.s32.totalorder %s19, 1
      %p111 = por %p109, %p110
      %p112 = scmp.ne.s32.totalorder %s101, %s102
      %p113 = scmp.eq.s32.totalorder %s19, 0
      %p114 = por %p112, %p113
      %p115 = scmp.ne.s32.totalorder %s101, %s102
      %p116 = scmp.eq.s32.totalorder %s20, 1
      %p117 = por %p115, %p116
      %p119 = scmp.ne.s32.totalorder %s102, %s118
      %p120 = scmp.eq.s32.totalorder %s20, 0
      %p121 = por %p119, %p120
      %p122 = scmp.le.s32.totalorder 1, %s14
      %p123 = scmp.lt.s32.totalorder %s14, 3
      %p124 = pnand %p122, %p123
      %p125 = pneg %p124
      // Predicated region
      $region9: #{tpu_custom_call.1} parent=5 // pred_check
        _
      $region10: #{tpu_custom_call.1} parent=5 // pred_check_branch
        %127 = sbr.rel (%p124) target = $region12
      $region11: #{tpu_custom_call.1} parent=5 // pred_region
        %s128 = ssub.s32 %s14, 1
        // Predicated region
        $region13: #{tpu_custom_call.1} parent=11 // pred_check
          %p129 = pneg %p84
        $region14: #{tpu_custom_call.1} parent=11 // pred_check_branch
          %131 = sbr.rel (%p129) target = $region16
        $region15: #{tpu_custom_call.1} parent=11 // pred_region
          _
        $region16: #{tpu_custom_call.1} parent=11 // pred_fallthru
          _
      $region12: #{tpu_custom_call.1} parent=5 // pred_fallthru
        _
      %p132 = scmp.lt.s32.totalorder %s14, 2
      // Predicated region
      $region17: #{tpu_custom_call.1} parent=5 // pred_check
        %p133 = pneg %p132
      $region18: #{tpu_custom_call.1} parent=5 // pred_check_branch
        %135 = sbr.rel (%p133) target = $region20
      $region19: #{tpu_custom_call.1} parent=5 // pred_region
        // Predicated region
        $region21: #{tpu_custom_call.1} parent=19 // pred_check
          %p136 = pneg %p57
        $region22: #{tpu_custom_call.1} parent=19 // pred_check_branch
          %138 = sbr.rel (%p136) target = $region24
        $region23: #{tpu_custom_call.1} parent=19 // pred_region
          %s139 = sand.u32 %s47, 1
          %s140 = scalar_lea.sflag [#allocation3], %s139
          %s141 = sand.u32 %s47, 1
          %s142 = smul.addr %s141, 64
          %s143 = scalar_lea.vmem [#allocation2], %s142
          %s144 = smul.u32 4, %s22
          %s145 = smul.u32 8, %s23
          %s147 = ssub.s32 1024, 1024
          %148 = vsyncadd %s140, %s147
          %s149 = smul.addr %s144, 8
          %s150 = sadd.s32 %s145, %s149
          %s151 = smul.addr %s21, 32
          %s152 = sadd.s32 %s150, %s151
          %s153 = smul.addr %s152, 32
          %s154 = scalar_lea.hbm %s0, %s153
          %s155 = sshll.u32 %s143, 4
          %s156 = int_to_ptr.vmem [resolvable:$true] %s155
          %161 = dma.hbm_to_vmem [thread:$0]  %s154, 1024, %s156, %s140, 32, 32, 2
        $region24: #{tpu_custom_call.1} parent=19 // pred_fallthru
          _
      $region20: #{tpu_custom_call.1} parent=5 // pred_fallthru
        _
      %p162 = scmp.le.s32.totalorder 1, %s14
      %p163 = scmp.lt.s32.totalorder %s14, 3
      %p164 = pnand %p162, %p163
      %p165 = pneg %p164
      // Predicated region
      $region25: #{tpu_custom_call.1} parent=5 // pred_check
        _
      $region26: #{tpu_custom_call.1} parent=5 // pred_check_branch
        %167 = sbr.rel (%p164) target = $region28
      $region27: #{tpu_custom_call.1} parent=5 // pred_region
        %s168 = ssub.s32 %s14, 1
        %s169 = sand.u32 %s50, 1
        %s170 = scalar_lea.sflag [#allocation3], %s169
        %s171 = sand.u32 %s50, 1
        %s172 = smul.addr %s171, 64
        %s173 = scalar_lea.vmem [#allocation2], %s172
        // Predicated region
        $region29: #{tpu_custom_call.1} parent=27 // pred_check
          %p174 = pneg %p63
        $region30: #{tpu_custom_call.1} parent=27 // pred_check_branch
          %176 = sbr.rel (%p174) target = $region32
        $region31: #{tpu_custom_call.1} parent=27 // pred_region
          %177 = dma.done %s170, 1024
        $region32: #{tpu_custom_call.1} parent=27 // pred_fallthru
          _
        %s178 = sand.u32 %s50, 1
        %s179 = scalar_lea.sflag [#allocation3], %s178
        %s180 = sand.u32 %s50, 1
        %s181 = smul.addr %s180, 64
        %s182 = scalar_lea.vmem [#allocation2], %s181
        %p183 = pneg %p63
        %p184 = pneg %p60
        %p185 = pneg %p84
        %p186 = pneg %p81
        %p187 = pneg %p114
        %p188 = pneg %p111
        %s189 = sand.u32 %s101, 1
        %s190 = scalar_lea.sflag [#allocation4], %s189
        %s191 = sand.u32 %s101, 1
        %s192 = smul.addr %s191, 128
        %s193 = scalar_lea.vmem [#allocation5], %s192
        %s194 = smul.u32 4, %s25
        %s195 = smul.u32 8, %s26
        %s196 = smul.u32 4, %s25
        %v197 = vld [vmem:[%s173] sm:$0x1]
        %v198 = vld [vmem:[%s173 + $0x2] sm:$0x1]
        %v199 = vld [vmem:[%s173 + $0x4] sm:$0x1]
        %v200 = vld [vmem:[%s173 + $0x6] sm:$0x1]
        %v201 = vld [vmem:[%s173 + $0x8] sm:$0x1]
        %v202 = vld [vmem:[%s173 + $0xa] sm:$0x1]
        %v203 = vld [vmem:[%s173 + $0xc] sm:$0x1]
        %v204 = vld [vmem:[%s173 + $0xe] sm:$0x1]
        %v205 = vld [vmem:[%s173 + $0x10] sm:$0x1]
        %v206 = vld [vmem:[%s173 + $0x12] sm:$0x1]
        %v207 = vld [vmem:[%s173 + $0x14] sm:$0x1]
        %v208 = vld [vmem:[%s173 + $0x16] sm:$0x1]
        %v209 = vld [vmem:[%s173 + $0x18] sm:$0x1]
        %v210 = vld [vmem:[%s173 + $0x1a] sm:$0x1]
        %v211 = vld [vmem:[%s173 + $0x1c] sm:$0x1]
        %v212 = vld [vmem:[%s173 + $0x1e] sm:$0x1]
        %v213 = vld [vmem:[%s173 + $0x20] sm:$0x1]
        %v214 = vld [vmem:[%s173 + $0x22] sm:$0x1]
        %v215 = vld [vmem:[%s173 + $0x24] sm:$0x1]
        %v216 = vld [vmem:[%s173 + $0x26] sm:$0x1]
        %v217 = vld [vmem:[%s173 + $0x28] sm:$0x1]
        %v218 = vld [vmem:[%s173 + $0x2a] sm:$0x1]
        %v219 = vld [vmem:[%s173 + $0x2c] sm:$0x1]
        %v220 = vld [vmem:[%s173 + $0x2e] sm:$0x1]
        %v221 = vld [vmem:[%s173 + $0x30] sm:$0x1]
        %v222 = vld [vmem:[%s173 + $0x32] sm:$0x1]
        %v223 = vld [vmem:[%s173 + $0x34] sm:$0x1]
        %v224 = vld [vmem:[%s173 + $0x36] sm:$0x1]
        %v225 = vld [vmem:[%s173 + $0x38] sm:$0x1]
        %v226 = vld [vmem:[%s173 + $0x3a] sm:$0x1]
        %v227 = vld [vmem:[%s173 + $0x3c] sm:$0x1]
        %v228 = vld [vmem:[%s173 + $0x3e] sm:$0x1]
        %v229 = vld [vmem:[%s1] sm:$0xff]
        %v230 = vld [vmem:[%s1 + $0x8] sm:$0xff]
        %v263 = vrot.slane %v198, 7
        %vm264 = vcmask 1041409
        %v265 = vsel %vm264, %v263, %v197
        %v266 = vrot.slane %v199, 6
        %vm267 = vcmask 1042434
        %v268 = vsel %vm267, %v266, %v265
        %v269 = vrot.slane %v200, 5
        %vm270 = vcmask 1043459
        %v271 = vsel %vm270, %v269, %v268
        %v272 = vrot.slane %v201, 4
        %vm273 = vcmask 1044484
        %v274 = vsel %vm273, %v272, %v271
        %v275 = vrot.slane %v202, 3
        %vm276 = vcmask 1045509
        %v277 = vsel %vm276, %v275, %v274
        %v278 = vrot.slane %v203, 2
        %vm279 = vcmask 1046534
        %v280 = vsel %vm279, %v278, %v277
        %v281 = vrot.slane %v204, 1
        %vm282 = vcmask 1047559
        %v283 = vsel %vm282, %v281, %v280
        %v284 = vrot.slane %v206, 7
        %v285 = vsel %vm264, %v284, %v205
        %v286 = vrot.slane %v207, 6
        %v287 = vsel %vm267, %v286, %v285
        %v288 = vrot.slane %v208, 5
        %v289 = vsel %vm270, %v288, %v287
        %v290 = vrot.slane %v209, 4
        %v291 = vsel %vm273, %v290, %v289
        %v292 = vrot.slane %v210, 3
        %v293 = vsel %vm276, %v292, %v291
        %v294 = vrot.slane %v211, 2
        %v295 = vsel %vm279, %v294, %v293
        %v296 = vrot.slane %v212, 1
        %v297 = vsel %vm282, %v296, %v295
        %v298 = vrot.slane %v214, 7
        %v299 = vsel %vm264, %v298, %v213
        %v300 = vrot.slane %v215, 6
        %v301 = vsel %vm267, %v300, %v299
        %v302 = vrot.slane %v216, 5
        %v303 = vsel %vm270, %v302, %v301
        %v304 = vrot.slane %v217, 4
        %v305 = vsel %vm273, %v304, %v303
        %v306 = vrot.slane %v218, 3
        %v307 = vsel %vm276, %v306, %v305
        %v308 = vrot.slane %v219, 2
        %v309 = vsel %vm279, %v308, %v307
        %v310 = vrot.slane %v220, 1
        %v311 = vsel %vm282, %v310, %v309
        %v312 = vrot.slane %v222, 7
        %v313 = vsel %vm264, %v312, %v221
        %v314 = vrot.slane %v223, 6
        %v315 = vsel %vm267, %v314, %v313
        %v316 = vrot.slane %v224, 5
        %v317 = vsel %vm270, %v316, %v315
        %v318 = vrot.slane %v225, 4
        %v319 = vsel %vm273, %v318, %v317
        %v320 = vrot.slane %v226, 3
        %v321 = vsel %vm276, %v320, %v319
        %v322 = vrot.slane %v227, 2
        %v323 = vsel %vm279, %v322, %v321
        %v324 = vrot.slane %v228, 1
        %v325 = vsel %vm282, %v324, %v323
        %vm326 = vcmask 130048
        %v327 = vsel %vm326, %v283, 0
        %v329 = vsel %vm326, %v297, 0
        %v331 = vsel %vm326, %v311, 0
        %v333 = vsel %vm326, %v325, 0
        %335 = vmatprep.subr.mxu0 0.0
        %336 = vmatpush1.msra.mxu0 %v229
        %337 = vmatprep.subr.mxu0 0.0
        %338 = vmatpush1.msra.mxu0 %v230
        %339 = vmatprep.subr.mxu0 0.0
        %340 = vmatpush1.msra.mxu0 0.0
        %341 = vmatprep.subr.mxu0 0.0
        %342 = vmatpush1.msra.mxu0 0.0
        %343 = vmatprep.subr.mxu0 0.0
        %344 = vmatpush1.msra.mxu0 0.0
        %345 = vmatprep.subr.mxu0 0.0
        %346 = vmatpush1.msra.mxu0 0.0
        %347 = vmatprep.subr.mxu0 0.0
        %348 = vmatpush1.msra.mxu0 0.0
        %349 = vmatprep.subr.mxu0 0.0
        %350 = vmatpush1.msra.mxu0 0.0
        %351 = vmatprep.subr.mxu0 0.0
        %352 = vmatpush1.msra.mxu0 0.0
        %353 = vmatprep.subr.mxu0 0.0
        %354 = vmatpush1.msra.mxu0 0.0
        %355 = vmatprep.subr.mxu0 0.0
        %356 = vmatpush1.msra.mxu0 0.0
        %357 = vmatprep.subr.mxu0 0.0
        %358 = vmatpush1.msra.mxu0 0.0
        %359 = vmatprep.subr.mxu0 0.0
        %360 = vmatpush1.msra.mxu0 0.0
        %361 = vmatprep.subr.mxu0 0.0
        %362 = vmatpush1.msra.mxu0 0.0
        %363 = vmatprep.subr.mxu0 0.0
        %364 = vmatpush1.msra.mxu0 0.0
        %365 = vmatprep.subr.mxu0 0.0
        %366 = vmatpush1.msra.mxu0 0.0
        %367 = vmatprep.subr.mxu0 0.0
        %368 = vmatpush1.msra.mxu0 0.0
        %369 = vmatprep.subr.mxu0 0.0
        %370 = vmatpush1.msra.mxu0 0.0
        %371 = vmatprep.subr.mxu0 0.0
        %372 = vmatpush1.msra.mxu0 0.0
        %373 = vmatprep.subr.mxu0 0.0
        %374 = vmatpush1.msra.mxu0 0.0
        %375 = vmatprep.subr.mxu0 0.0
        %376 = vmatpush1.msra.mxu0 0.0
        %377 = vmatprep.subr.mxu0 0.0
        %378 = vmatpush1.msra.mxu0 0.0
        %379 = vmatprep.subr.mxu0 0.0
        %380 = vmatpush1.msra.mxu0 0.0
        %381 = vmatprep.subr.mxu0 0.0
        %382 = vmatpush1.msra.mxu0 0.0
        %383 = vmatprep.subr.mxu0 0.0
        %384 = vmatpush1.msra.mxu0 0.0
        %385 = vmatprep.subr.mxu0 0.0
        %386 = vmatpush1.msra.mxu0 0.0
        %387 = vmatprep.subr.mxu0 0.0
        %388 = vmatpush1.msra.mxu0 0.0
        %389 = vmatprep.subr.mxu0 0.0
        %390 = vmatpush1.msra.mxu0 0.0
        %391 = vmatprep.subr.mxu0 0.0
        %392 = vmatpush1.msra.mxu0 0.0
        %393 = vmatprep.subr.mxu0 0.0
        %394 = vmatpush1.msra.mxu0 0.0
        %395 = vmatprep.subr.mxu0 0.0
        %396 = vmatpush1.msra.mxu0 0.0
        %397 = vmatprep.subr.mxu0 0.0
        %398 = vmatpush1.msra.mxu0 0.0
        %399 = vmatprep.mubr.f32.mxu0 0.0
        %400 = vmatmul.mubr.f32.gmra.mrb[0].mxu0 %v327
        %v401 = vpop.f32.mrb[0].mxu0
        %v402 = vadd.f32 0.0, %v401
        %v403 = vpop.f32.mrb[0].mxu0
        %404 = vmatprep.mubr.f32.mxu0 0.0
        %405 = vmatmul.mubr.f32.gmra.mrb[0].mxu0 %v329
        %v406 = vpop.f32.mrb[0].mxu0
        %v407 = vadd.f32 0.0, %v406
        %v408 = vpop.f32.mrb[0].mxu0
        %409 = vmatprep.mubr.f32.mxu0 0.0
        %410 = vmatmul.mubr.f32.gmra.mrb[0].mxu0 %v331
        %v411 = vpop.f32.mrb[0].mxu0
        %v412 = vadd.f32 0.0, %v411
        %v413 = vpop.f32.mrb[0].mxu0
        %414 = vmatprep.mubr.f32.mxu0 0.0
        %415 = vmatmul.mubr.f32.gmra.mrb[0].mxu0 %v333
        %v416 = vpop.f32.mrb[0].mxu0
        %v417 = vadd.f32 0.0, %v416
        %v418 = vpop.f32.mrb[0].mxu0
        %419 = vdwg.mxu0
        %vm420 = vcmask 64512
        %421 = vst.msk [vmem:[%s193] sm:$0xff] %vm420, %v402
        %422 = vst.msk [vmem:[%s193 + $0x20] sm:$0xff] %vm420, %v407
        %423 = vst.msk [vmem:[%s193 + $0x40] sm:$0xff] %vm420, %v412
        %424 = vst.msk [vmem:[%s193 + $0x60] sm:$0xff] %vm420, %v417
        %s425 = scalar_lea.vmem %s1, 16
        %v426 = vld [vmem:[%s425] sm:$0xff]
        %v427 = vld [vmem:[%s425 + $0x8] sm:$0xff]
        %428 = vmatprep.subr.mxu0 0.0
        %429 = vmatpush1.msra.mxu0 %v426
        %430 = vmatprep.subr.mxu0 0.0
        %431 = vmatpush1.msra.mxu0 %v427
        %432 = vmatprep.subr.mxu0 0.0
        %433 = vmatpush1.msra.mxu0 0.0
        %434 = vmatprep.subr.mxu0 0.0
        %435 = vmatpush1.msra.mxu0 0.0
        %436 = vmatprep.subr.mxu0 0.0
        %437 = vmatpush1.msra.mxu0 0.0
        %438 = vmatprep.subr.mxu0 0.0
        %439 = vmatpush1.msra.mxu0 0.0
        %440 = vmatprep.subr.mxu0 0.0
        %441 = vmatpush1.msra.mxu0 0.0
        %442 = vmatprep.subr.mxu0 0.0
        %443 = vmatpush1.msra.mxu0 0.0
        %444 = vmatprep.subr.mxu0 0.0
        %445 = vmatpush1.msra.mxu0 0.0
        %446 = vmatprep.subr.mxu0 0.0
        %447 = vmatpush1.msra.mxu0 0.0
        %448 = vmatprep.subr.mxu0 0.0
        %449 = vmatpush1.msra.mxu0 0.0
        %450 = vmatprep.subr.mxu0 0.0
        %451 = vmatpush1.msra.mxu0 0.0
        %452 = vmatprep.subr.mxu0 0.0
        %453 = vmatpush1.msra.mxu0 0.0
        %454 = vmatprep.subr.mxu0 0.0
        %455 = vmatpush1.msra.mxu0 0.0
        %456 = vmatprep.subr.mxu0 0.0
        %457 = vmatpush1.msra.mxu0 0.0
        %458 = vmatprep.subr.mxu0 0.0
        %459 = vmatpush1.msra.mxu0 0.0
        %460 = vmatprep.subr.mxu0 0.0
        %461 = vmatpush1.msra.mxu0 0.0
        %462 = vmatprep.subr.mxu0 0.0
        %463 = vmatpush1.msra.mxu0 0.0
        %464 = vmatprep.subr.mxu0 0.0
        %465 = vmatpush1.msra.mxu0 0.0
        %466 = vmatprep.subr.mxu0 0.0
        %467 = vmatpush1.msra.mxu0 0.0
        %468 = vmatprep.subr.mxu0 0.0
        %469 = vmatpush1.msra.mxu0 0.0
        %470 = vmatprep.subr.mxu0 0.0
        %471 = vmatpush1.msra.mxu0 0.0
        %472 = vmatprep.subr.mxu0 0.0
        %473 = vmatpush1.msra.mxu0 0.0
        %474 = vmatprep.subr.mxu0 0.0
        %475 = vmatpush1.msra.mxu0 0.0
        %476 = vmatprep.subr.mxu0 0.0
        %477 = vmatpush1.msra.mxu0 0.0
        %478 = vmatprep.subr.mxu0 0.0
        %479 = vmatpush1.msra.mxu0 0.0
        %480 = vmatprep.subr.mxu0 0.0
        %481 = vmatpush1.msra.mxu0 0.0
        %482 = vmatprep.subr.mxu0 0.0
        %483 = vmatpush1.msra.mxu0 0.0
        %484 = vmatprep.subr.mxu0 0.0
        %485 = vmatpush1.msra.mxu0 0.0
        %486 = vmatprep.subr.mxu0 0.0
        %487 = vmatpush1.msra.mxu0 0.0
        %488 = vmatprep.subr.mxu0 0.0
        %489 = vmatpush1.msra.mxu0 0.0
        %490 = vmatprep.subr.mxu0 0.0
        %491 = vmatpush1.msra.mxu0 0.0
        %492 = vmatprep.mubr.f32.mxu0 0.0
        %493 = vmatmul.mubr.f32.gmra.mrb[0].mxu0 %v327
        %v494 = vpop.f32.mrb[0].mxu0
        %v495 = vadd.f32 0.0, %v494
        %v496 = vpop.f32.mrb[0].mxu0
        %497 = vmatprep.mubr.f32.mxu0 0.0
        %498 = vmatmul.mubr.f32.gmra.mrb[0].mxu0 %v329
        %v499 = vpop.f32.mrb[0].mxu0
        %v500 = vadd.f32 0.0, %v499
        %v501 = vpop.f32.mrb[0].mxu0
        %502 = vmatprep.mubr.f32.mxu0 0.0
        %503 = vmatmul.mubr.f32.gmra.mrb[0].mxu0 %v331
        %v504 = vpop.f32.mrb[0].mxu0
        %v505 = vadd.f32 0.0, %v504
        %v506 = vpop.f32.mrb[0].mxu0
        %507 = vmatprep.mubr.f32.mxu0 0.0
        %508 = vmatmul.mubr.f32.gmra.mrb[0].mxu0 %v333
        %v509 = vpop.f32.mrb[0].mxu0
        %v510 = vadd.f32 0.0, %v509
        %v511 = vpop.f32.mrb[0].mxu0
        %512 = vdwg.mxu0
        %s513 = scalar_lea.vmem %s193, 8 [#allocation5]
        %514 = vst.msk [vmem:[%s513] sm:$0xff] %vm420, %v495
        %515 = vst.msk [vmem:[%s513 + $0x20] sm:$0xff] %vm420, %v500
        %516 = vst.msk [vmem:[%s513 + $0x40] sm:$0xff] %vm420, %v505
        %517 = vst.msk [vmem:[%s513 + $0x60] sm:$0xff] %vm420, %v510
        %v518 = vld [vmem:[%s173 + $0x1] sm:$0x1]
        %v519 = vld [vmem:[%s173 + $0x3] sm:$0x1]
        %v520 = vld [vmem:[%s173 + $0x5] sm:$0x1]
        %v521 = vld [vmem:[%s173 + $0x7] sm:$0x1]
        %v522 = vld [vmem:[%s173 + $0x9] sm:$0x1]
        %v523 = vld [vmem:[%s173 + $0xb] sm:$0x1]
        %v524 = vld [vmem:[%s173 + $0xd] sm:$0x1]
        %v525 = vld [vmem:[%s173 + $0xf] sm:$0x1]
        %v526 = vld [vmem:[%s173 + $0x11] sm:$0x1]
        %v527 = vld [vmem:[%s173 + $0x13] sm:$0x1]
        %v528 = vld [vmem:[%s173 + $0x15] sm:$0x1]
        %v529 = vld [vmem:[%s173 + $0x17] sm:$0x1]
        %v530 = vld [vmem:[%s173 + $0x19] sm:$0x1]
        %v531 = vld [vmem:[%s173 + $0x1b] sm:$0x1]
        %v532 = vld [vmem:[%s173 + $0x1d] sm:$0x1]
        %v533 = vld [vmem:[%s173 + $0x1f] sm:$0x1]
        %v534 = vld [vmem:[%s173 + $0x21] sm:$0x1]
        %v535 = vld [vmem:[%s173 + $0x23] sm:$0x1]
        %v536 = vld [vmem:[%s173 + $0x25] sm:$0x1]
        %v537 = vld [vmem:[%s173 + $0x27] sm:$0x1]
        %v538 = vld [vmem:[%s173 + $0x29] sm:$0x1]
        %v539 = vld [vmem:[%s173 + $0x2b] sm:$0x1]
        %v540 = vld [vmem:[%s173 + $0x2d] sm:$0x1]
        %v541 = vld [vmem:[%s173 + $0x2f] sm:$0x1]
        %v542 = vld [vmem:[%s173 + $0x31] sm:$0x1]
        %v543 = vld [vmem:[%s173 + $0x33] sm:$0x1]
        %v544 = vld [vmem:[%s173 + $0x35] sm:$0x1]
        %v545 = vld [vmem:[%s173 + $0x37] sm:$0x1]
        %v546 = vld [vmem:[%s173 + $0x39] sm:$0x1]
        %v547 = vld [vmem:[%s173 + $0x3b] sm:$0x1]
        %v548 = vld [vmem:[%s173 + $0x3d] sm:$0x1]
        %v549 = vld [vmem:[%s173 + $0x3f] sm:$0x1]
        %v550 = vld [vmem:[%s1] sm:$0xff]
        %v551 = vld [vmem:[%s1 + $0x8] sm:$0xff]
        %v584 = vrot.slane %v519, 7
        %v585 = vsel %vm264, %v584, %v518
        %v586 = vrot.slane %v520, 6
        %v587 = vsel %vm267, %v586, %v585
        %v588 = vrot.slane %v521, 5
        %v589 = vsel %vm270, %v588, %v587
        %v590 = vrot.slane %v522, 4
        %v591 = vsel %vm273, %v590, %v589
        %v592 = vrot.slane %v523, 3
        %v593 = vsel %vm276, %v592, %v591
        %v594 = vrot.slane %v524, 2
        %v595 = vsel %vm279, %v594, %v593
        %v596 = vrot.slane %v525, 1
        %v597 = vsel %vm282, %v596, %v595
        %v598 = vrot.slane %v527, 7
        %v599 = vsel %vm264, %v598, %v526
        %v600 = vrot.slane %v528, 6
        %v601 = vsel %vm267, %v600, %v599
        %v602 = vrot.slane %v529, 5
        %v603 = vsel %vm270, %v602, %v601
        %v604 = vrot.slane %v530, 4
        %v605 = vsel %vm273, %v604, %v603
        %v606 = vrot.slane %v531, 3
        %v607 = vsel %vm276, %v606, %v605
        %v608 = vrot.slane %v532, 2
        %v609 = vsel %vm279, %v608, %v607
        %v610 = vrot.slane %v533, 1
        %v611 = vsel %vm282, %v610, %v609
        %v612 = vrot.slane %v535, 7
        %v613 = vsel %vm264, %v612, %v534
        %v614 = vrot.slane %v536, 6
        %v615 = vsel %vm267, %v614, %v613
        %v616 = vrot.slane %v537, 5
        %v617 = vsel %vm270, %v616, %v615
        %v618 = vrot.slane %v538, 4
        %v619 = vsel %vm273, %v618, %v617
        %v620 = vrot.slane %v539, 3
        %v621 = vsel %vm276, %v620, %v619
        %v622 = vrot.slane %v540, 2
        %v623 = vsel %vm279, %v622, %v621
        %v624 = vrot.slane %v541, 1
        %v625 = vsel %vm282, %v624, %v623
        %v626 = vrot.slane %v543, 7
        %v627 = vsel %vm264, %v626, %v542
        %v628 = vrot.slane %v544, 6
        %v629 = vsel %vm267, %v628, %v627
        %v630 = vrot.slane %v545, 5
        %v631 = vsel %vm270, %v630, %v629
        %v632 = vrot.slane %v546, 4
        %v633 = vsel %vm273, %v632, %v631
        %v634 = vrot.slane %v547, 3
        %v635 = vsel %vm276, %v634, %v633
        %v636 = vrot.slane %v548, 2
        %v637 = vsel %vm279, %v636, %v635
        %v638 = vrot.slane %v549, 1
        %v639 = vsel %vm282, %v638, %v637
        %v640 = vsel %vm326, %v597, 0
        %v642 = vsel %vm326, %v611, 0
        %v644 = vsel %vm326, %v625, 0
        %v646 = vsel %vm326, %v639, 0
        %648 = vmatprep.subr.mxu0 0.0
        %649 = vmatpush1.msra.mxu0 %v550
        %650 = vmatprep.subr.mxu0 0.0
        %651 = vmatpush1.msra.mxu0 %v551
        %652 = vmatprep.subr.mxu0 0.0
        %653 = vmatpush1.msra.mxu0 0.0
        %654 = vmatprep.subr.mxu0 0.0
        %655 = vmatpush1.msra.mxu0 0.0
        %656 = vmatprep.subr.mxu0 0.0
        %657 = vmatpush1.msra.mxu0 0.0
        %658 = vmatprep.subr.mxu0 0.0
        %659 = vmatpush1.msra.mxu0 0.0
        %660 = vmatprep.subr.mxu0 0.0
        %661 = vmatpush1.msra.mxu0 0.0
        %662 = vmatprep.subr.mxu0 0.0
        %663 = vmatpush1.msra.mxu0 0.0
        %664 = vmatprep.subr.mxu0 0.0
        %665 = vmatpush1.msra.mxu0 0.0
        %666 = vmatprep.subr.mxu0 0.0
        %667 = vmatpush1.msra.mxu0 0.0
        %668 = vmatprep.subr.mxu0 0.0
        %669 = vmatpush1.msra.mxu0 0.0
        %670 = vmatprep.subr.mxu0 0.0
        %671 = vmatpush1.msra.mxu0 0.0
        %672 = vmatprep.subr.mxu0 0.0
        %673 = vmatpush1.msra.mxu0 0.0
        %674 = vmatprep.subr.mxu0 0.0
        %675 = vmatpush1.msra.mxu0 0.0
        %676 = vmatprep.subr.mxu0 0.0
        %677 = vmatpush1.msra.mxu0 0.0
        %678 = vmatprep.subr.mxu0 0.0
        %679 = vmatpush1.msra.mxu0 0.0
        %680 = vmatprep.subr.mxu0 0.0
        %681 = vmatpush1.msra.mxu0 0.0
        %682 = vmatprep.subr.mxu0 0.0
        %683 = vmatpush1.msra.mxu0 0.0
        %684 = vmatprep.subr.mxu0 0.0
        %685 = vmatpush1.msra.mxu0 0.0
        %686 = vmatprep.subr.mxu0 0.0
        %687 = vmatpush1.msra.mxu0 0.0
        %688 = vmatprep.subr.mxu0 0.0
        %689 = vmatpush1.msra.mxu0 0.0
        %690 = vmatprep.subr.mxu0 0.0
        %691 = vmatpush1.msra.mxu0 0.0
        %692 = vmatprep.subr.mxu0 0.0
        %693 = vmatpush1.msra.mxu0 0.0
        %694 = vmatprep.subr.mxu0 0.0
        %695 = vmatpush1.msra.mxu0 0.0
        %696 = vmatprep.subr.mxu0 0.0
        %697 = vmatpush1.msra.mxu0 0.0
        %698 = vmatprep.subr.mxu0 0.0
        %699 = vmatpush1.msra.mxu0 0.0
        %700 = vmatprep.subr.mxu0 0.0
        %701 = vmatpush1.msra.mxu0 0.0
        %702 = vmatprep.subr.mxu0 0.0
        %703 = vmatpush1.msra.mxu0 0.0
        %704 = vmatprep.subr.mxu0 0.0
        %705 = vmatpush1.msra.mxu0 0.0
        %706 = vmatprep.subr.mxu0 0.0
        %707 = vmatpush1.msra.mxu0 0.0
        %708 = vmatprep.subr.mxu0 0.0
        %709 = vmatpush1.msra.mxu0 0.0
        %710 = vmatprep.subr.mxu0 0.0
        %711 = vmatpush1.msra.mxu0 0.0
        %712 = vmatprep.mubr.f32.mxu0 0.0
        %713 = vmatmul.mubr.f32.gmra.mrb[0].mxu0 %v640
        %v714 = vpop.f32.mrb[0].mxu0
        %v715 = vadd.f32 0.0, %v714
        %v716 = vpop.f32.mrb[0].mxu0
        %717 = vmatprep.mubr.f32.mxu0 0.0
        %718 = vmatmul.mubr.f32.gmra.mrb[0].mxu0 %v642
        %v719 = vpop.f32.mrb[0].mxu0
        %v720 = vadd.f32 0.0, %v719
        %v721 = vpop.f32.mrb[0].mxu0
        %722 = vmatprep.mubr.f32.mxu0 0.0
        %723 = vmatmul.mubr.f32.gmra.mrb[0].mxu0 %v644
        %v724 = vpop.f32.mrb[0].mxu0
        %v725 = vadd.f32 0.0, %v724
        %v726 = vpop.f32.mrb[0].mxu0
        %727 = vmatprep.mubr.f32.mxu0 0.0
        %728 = vmatmul.mubr.f32.gmra.mrb[0].mxu0 %v646
        %v729 = vpop.f32.mrb[0].mxu0
        %v730 = vadd.f32 0.0, %v729
        %v731 = vpop.f32.mrb[0].mxu0
        %732 = vdwg.mxu0
        %s733 = scalar_lea.vmem %s193, 16 [#allocation5]
        %734 = vst.msk [vmem:[%s733] sm:$0xff] %vm420, %v715
        %735 = vst.msk [vmem:[%s733 + $0x20] sm:$0xff] %vm420, %v720
        %736 = vst.msk [vmem:[%s733 + $0x40] sm:$0xff] %vm420, %v725
        %737 = vst.msk [vmem:[%s733 + $0x60] sm:$0xff] %vm420, %v730
        %v738 = vld [vmem:[%s425] sm:$0xff]
        %v739 = vld [vmem:[%s425 + $0x8] sm:$0xff]
        %740 = vmatprep.subr.mxu0 0.0
        %741 = vmatpush1.msra.mxu0 %v738
        %742 = vmatprep.subr.mxu0 0.0
        %743 = vmatpush1.msra.mxu0 %v739
        %744 = vmatprep.subr.mxu0 0.0
        %745 = vmatpush1.msra.mxu0 0.0
        %746 = vmatprep.subr.mxu0 0.0
        %747 = vmatpush1.msra.mxu0 0.0
        %748 = vmatprep.subr.mxu0 0.0
        %749 = vmatpush1.msra.mxu0 0.0
        %750 = vmatprep.subr.mxu0 0.0
        %751 = vmatpush1.msra.mxu0 0.0
        %752 = vmatprep.subr.mxu0 0.0
        %753 = vmatpush1.msra.mxu0 0.0
        %754 = vmatprep.subr.mxu0 0.0
        %755 = vmatpush1.msra.mxu0 0.0
        %756 = vmatprep.subr.mxu0 0.0
        %757 = vmatpush1.msra.mxu0 0.0
        %758 = vmatprep.subr.mxu0 0.0
        %759 = vmatpush1.msra.mxu0 0.0
        %760 = vmatprep.subr.mxu0 0.0
        %761 = vmatpush1.msra.mxu0 0.0
        %762 = vmatprep.subr.mxu0 0.0
        %763 = vmatpush1.msra.mxu0 0.0
        %764 = vmatprep.subr.mxu0 0.0
        %765 = vmatpush1.msra.mxu0 0.0
        %766 = vmatprep.subr.mxu0 0.0
        %767 = vmatpush1.msra.mxu0 0.0
        %768 = vmatprep.subr.mxu0 0.0
        %769 = vmatpush1.msra.mxu0 0.0
        %770 = vmatprep.subr.mxu0 0.0
        %771 = vmatpush1.msra.mxu0 0.0
        %772 = vmatprep.subr.mxu0 0.0
        %773 = vmatpush1.msra.mxu0 0.0
        %774 = vmatprep.subr.mxu0 0.0
        %775 = vmatpush1.msra.mxu0 0.0
        %776 = vmatprep.subr.mxu0 0.0
        %777 = vmatpush1.msra.mxu0 0.0
        %778 = vmatprep.subr.mxu0 0.0
        %779 = vmatpush1.msra.mxu0 0.0
        %780 = vmatprep.subr.mxu0 0.0
        %781 = vmatpush1.msra.mxu0 0.0
        %782 = vmatprep.subr.mxu0 0.0
        %783 = vmatpush1.msra.mxu0 0.0
        %784 = vmatprep.subr.mxu0 0.0
        %785 = vmatpush1.msra.mxu0 0.0
        %786 = vmatprep.subr.mxu0 0.0
        %787 = vmatpush1.msra.mxu0 0.0
        %788 = vmatprep.subr.mxu0 0.0
        %789 = vmatpush1.msra.mxu0 0.0
        %790 = vmatprep.subr.mxu0 0.0
        %791 = vmatpush1.msra.mxu0 0.0
        %792 = vmatprep.subr.mxu0 0.0
        %793 = vmatpush1.msra.mxu0 0.0
        %794 = vmatprep.subr.mxu0 0.0
        %795 = vmatpush1.msra.mxu0 0.0
        %796 = vmatprep.subr.mxu0 0.0
        %797 = vmatpush1.msra.mxu0 0.0
        %798 = vmatprep.subr.mxu0 0.0
        %799 = vmatpush1.msra.mxu0 0.0
        %800 = vmatprep.subr.mxu0 0.0
        %801 = vmatpush1.msra.mxu0 0.0
        %802 = vmatprep.subr.mxu0 0.0
        %803 = vmatpush1.msra.mxu0 0.0
        %804 = vmatprep.mubr.f32.mxu0 0.0
        %805 = vmatmul.mubr.f32.gmra.mrb[0].mxu0 %v640
        %v806 = vpop.f32.mrb[0].mxu0
        %v807 = vadd.f32 0.0, %v806
        %v808 = vpop.f32.mrb[0].mxu0
        %809 = vmatprep.mubr.f32.mxu0 0.0
        %810 = vmatmul.mubr.f32.gmra.mrb[0].mxu0 %v642
        %v811 = vpop.f32.mrb[0].mxu0
        %v812 = vadd.f32 0.0, %v811
        %v813 = vpop.f32.mrb[0].mxu0
        %814 = vmatprep.mubr.f32.mxu0 0.0
        %815 = vmatmul.mubr.f32.gmra.mrb[0].mxu0 %v644
        %v816 = vpop.f32.mrb[0].mxu0
        %v817 = vadd.f32 0.0, %v816
        %v818 = vpop.f32.mrb[0].mxu0
        %819 = vmatprep.mubr.f32.mxu0 0.0
        %820 = vmatmul.mubr.f32.gmra.mrb[0].mxu0 %v646
        %v821 = vpop.f32.mrb[0].mxu0
        %v822 = vadd.f32 0.0, %v821
        %v823 = vpop.f32.mrb[0].mxu0
        %824 = vdwg.mxu0
        %s825 = scalar_lea.vmem %s193, 24 [#allocation5]
        %826 = vst.msk [vmem:[%s825] sm:$0xff] %vm420, %v807
        %827 = vst.msk [vmem:[%s825 + $0x20] sm:$0xff] %vm420, %v812
        %828 = vst.msk [vmem:[%s825 + $0x40] sm:$0xff] %vm420, %v817
        %829 = vst.msk [vmem:[%s825 + $0x60] sm:$0xff] %vm420, %v822
        %s830 = sand.u32 %s101, 1
        %s831 = scalar_lea.sflag [#allocation4], %s830
        %s832 = sand.u32 %s101, 1
        %s833 = smul.addr %s832, 128
        %s834 = scalar_lea.vmem [#allocation5], %s833
        // Predicated region
        $region33: #{tpu_custom_call.1} parent=27 // pred_check
          %p835 = pneg %p111
        $region34: #{tpu_custom_call.1} parent=27 // pred_check_branch
          %837 = sbr.rel (%p835) target = $region36
        $region35: #{tpu_custom_call.1} parent=27 // pred_region
          %s838 = smul.u32 4, %s25
          %s840 = ssub.s32 2048, 2048
          %841 = vsyncadd %s831, %s840
          %s842 = smul.addr %s838, 4
          %s843 = sadd.s32 %s26, %s842
          %s844 = smul.addr %s24, 16
          %s845 = sadd.s32 %s843, %s844
          %s846 = smul.addr %s845, 128
          %s847 = scalar_lea.hbm %s2, %s846
          %s848 = sshll.u32 %s834, 4
          %s849 = int_to_ptr.vmem [resolvable:$true] %s848
          %854 = dma.vmem_to_hbm [thread:$0]  %s849, 2048, %s847, %s831, 128, 128, 8
        $region36: #{tpu_custom_call.1} parent=27 // pred_fallthru
          _
      $region28: #{tpu_custom_call.1} parent=5 // pred_fallthru
        _
      %p855 = scmp.le.s32.totalorder 2, %s14
      // Predicated region
      $region37: #{tpu_custom_call.1} parent=5 // pred_check
        %p856 = pneg %p855
      $region38: #{tpu_custom_call.1} parent=5 // pred_check_branch
        %858 = sbr.rel (%p856) target = $region40
      $region39: #{tpu_custom_call.1} parent=5 // pred_region
        %s859 = ssub.s32 %s14, 2
        // Predicated region
        $region41: #{tpu_custom_call.1} parent=39 // pred_check
          %p860 = pneg %p117
        $region42: #{tpu_custom_call.1} parent=39 // pred_check_branch
          %862 = sbr.rel (%p860) target = $region44
        $region43: #{tpu_custom_call.1} parent=39 // pred_region
          %s863 = sand.u32 %s102, 1
          %s864 = scalar_lea.sflag [#allocation4], %s863
          %s865 = sand.u32 %s102, 1
          %s866 = smul.addr %s865, 128
          %s867 = scalar_lea.vmem [#allocation5], %s866
          %868 = dma.done %s864, 2048
        $region44: #{tpu_custom_call.1} parent=39 // pred_fallthru
          _
      $region40: #{tpu_custom_call.1} parent=5 // pred_fallthru
        _
    $region6: #{tpu_custom_call.1} parent=1 // loop_footer
      %s18 = sadd.s32 1, %s14
    $region7: #{tpu_custom_call.1} parent=1 // loop_footer_branch
      %13 = sbr.rel target = $region3
    $region8: #{tpu_custom_call.1} parent=1 // loop_exit
      _
    %869 = vsyncpa [#allocation3], 1
    %s870 = scalar_lea.sflag [#allocation3], 1
    %871 = vsyncpa %s870, 1
    %872 = vsyncpa [#allocation4], 1
    %s873 = scalar_lea.sflag [#allocation4], 1
    %874 = vsyncpa %s873, 1

</llo_original>
